<compile_context>
chip_gen: v7x
topology: tpu7x:2x2x1
jax: 0.10.0
libtpu: 0.0.40
codegen_flags: <defaults>
</compile_context>

<pallas_src>
import functools

import jax
import jax.numpy as jnp
from jax import lax
from jax.experimental import pallas as pl
from jax.experimental.pallas import tpu as pltpu

IN_EPS = 1e-3     # InstanceNorm2d eps in the module
BN_EPS = 1e-5     # BatchNorm2d default eps
_LANE = 128
_MIB = 1 << 20


def _round_up(x, m):
    return (x + m - 1) // m * m


def _attend_tail(y, xd, w_ref, b_ref, out_ref):
    """Shared tail: 1x1 conv -> softmax(dim=P) -> x_down @ S (normalized post-matmul)."""
    # 1x1 Conv2d == channel matmul: (P, C_in) @ (C_in, n) + bias
    embed = jnp.dot(w_ref[...], y, preferred_element_type=jnp.float32) + b_ref[...]   # (P, n)
    m = jnp.max(embed, axis=0, keepdims=True)
    e = jnp.exp(embed - m)                              # unnormalized softmax numerator (P, n)
    denom = jnp.sum(e, axis=0, keepdims=True)           # (1, n)
    # out = x_down @ softmax == (x_down @ e) / denom : normalize after the matmul
    o = jnp.dot(xd, e, preferred_element_type=jnp.float32)                             # (C_d, n)
    out_ref[0] = o * pl.reciprocal(denom, approx=False)


def _whole_kernel(xup_ref, xdown_ref, scale_ref, shift_ref, w_ref, b_ref, out_ref,
                  *, n_true, padded):
    """One batch element per grid step; InstanceNorm stats computed in-kernel."""
    x = xup_ref[0]                                      # (C_in, N_pad) f32
    inv_n = 1.0 / float(n_true)
    mu = jnp.sum(x, axis=-1, keepdims=True) * inv_n     # (C_in, 1)
    if padded:
        # zero-padded lanes contribute nothing to sum(x) / sum(x*x)
        var = jnp.sum(x * x, axis=-1, keepdims=True) * inv_n - mu * mu
    else:
        xc = x - mu
        var = jnp.sum(xc * xc, axis=-1, keepdims=True) * inv_n
    # InstanceNorm * folded eval-BatchNorm + ReLU
    a = lax.rsqrt(var + IN_EPS) * scale_ref[...]        # (C_in, 1)
    y = jnp.maximum((x - mu) * a + shift_ref[...], 0.0)
    _attend_tail(y, xdown_ref[0], w_ref, b_ref, out_ref)


def _tiled_kernel(xup_ref, xdown_ref, a_ref, c_ref, w_ref, b_ref, out_ref):
    """(batch, N-tile) grid; per-(b, c) IN stats pre-folded into a_ref / c_ref."""
    x = xup_ref[0]                                      # (C_in, tn) f32
    y = jnp.maximum(x * a_ref[0] + c_ref[0], 0.0)
    _attend_tail(y, xdown_ref[0], w_ref, b_ref, out_ref)


def diff_unpool(x_up, x_down, gamma, beta, run_mean, run_var, conv_w, conv_b,
                *, force_tile_n=None):
    """x_up: (B, C_in, N, 1); x_down: (B, C_d, P, 1); returns (B, C_d, N, 1)."""
    B, C_in, N, _ = x_up.shape
    _, C_d, P, _ = x_down.shape
    assert conv_w.shape == (P, C_in)
    f32 = jnp.float32

    # Drop the trailing unit dim with a reshape (metadata-only, no HBM pass);
    # only cast if the inputs are not already f32.
    xu = x_up.reshape(B, C_in, N)
    xd = x_down.reshape(B, C_d, P)
    if xu.dtype != f32:
        xu = xu.astype(f32)
    if xd.dtype != f32:
        xd = xd.astype(f32)

    # Fold eval-mode BatchNorm into a single per-channel scale/shift.
    scale = gamma.astype(f32) * lax.rsqrt(run_var.astype(f32) + BN_EPS)   # (C_in,)
    shift = beta.astype(f32) - scale * run_mean.astype(f32)               # (C_in,)
    w = conv_w.astype(f32)                                                # (P, C_in)
    bias = conv_b.reshape(P, 1).astype(f32)                               # (P, 1)

    # ---- plan: whole-N-per-batch block vs N-tiled grid, and the VMEM budget ----
    # f32 bytes resident per lane column per grid step:
    #   x_up block (x2 buffers) + out block (x2) + temps y, embed, e, o
    per_col = 4 * (2 * C_in + 2 * C_d + C_in + 2 * P + C_d)
    fixed = 4 * 2 * (C_d * P + 2 * C_in + P * C_in + P) + _MIB            # x_down, params, slack
    n128 = _round_up(N, _LANE)
    use_tiled = (force_tile_n is not None) or (per_col * n128 + fixed > 20 * _MIB)

    if not use_tiled:
        n_pad = n128
        xu_pad = xu if n_pad == N else jnp.pad(xu, ((0, 0), (0, 0), (0, n_pad - N)))
        vmem = int(min(max(per_col * n_pad + fixed + 8 * _MIB, 16 * _MIB), 36 * _MIB))
        kernel = functools.partial(_whole_kernel, n_true=N, padded=(n_pad != N))
        out = pl.pallas_call(
            kernel,
            out_shape=jax.ShapeDtypeStruct((B, C_d, n_pad), f32),
            grid_spec=pltpu.PrefetchScalarGridSpec(
                num_scalar_prefetch=0,
                grid=(B,),
                in_specs=[
                    pl.BlockSpec((1, C_in, n_pad), lambda b: (b, 0, 0)),   # x_up
                    pl.BlockSpec((1, C_d, P), lambda b: (b, 0, 0)),        # x_down
                    pl.BlockSpec((C_in, 1), lambda b: (0, 0)),             # folded BN scale
                    pl.BlockSpec((C_in, 1), lambda b: (0, 0)),             # folded BN shift
                    pl.BlockSpec((P, C_in), lambda b: (0, 0)),             # conv weight
                    pl.BlockSpec((P, 1), lambda b: (0, 0)),                # conv bias
                ],
                out_specs=pl.BlockSpec((1, C_d, n_pad), lambda b: (b, 0, 0)),
            ),
            compiler_params=pltpu.CompilerParams(
                dimension_semantics=("parallel",),
                vmem_limit_bytes=vmem,
            ),
        )(xu_pad, xd, scale.reshape(C_in, 1), shift.reshape(C_in, 1), w, bias)
    else:
        # Tile size: lane-aligned, sized so per-step residency stays small (pipelining +
        # fits v7x's 64 MiB VMEM); N padded up to a multiple of the tile.
        if force_tile_n is not None:
            tn = max(_LANE, _round_up(int(force_tile_n), _LANE))
        else:
            tn = max(_LANE, min(2048, ((12 * _MIB) // per_col) // _LANE * _LANE))
        n_pad = _round_up(N, tn)

        # Per-(b, c) InstanceNorm stats in ONE fused XLA reduction pass over x_up,
        # folded with the BN scale/shift so the kernel only does  y = x*A + C.
        ex = jnp.mean(xu, axis=-1)                       # (B, C_in)
        ex2 = jnp.mean(xu * xu, axis=-1)                 # (B, C_in)
        rsig = lax.rsqrt(ex2 - ex * ex + IN_EPS)         # biased variance, matches IN
        a_fold = (rsig * scale[None, :]).reshape(B, C_in, 1)
        c_fold = (shift[None, :] - ex * rsig * scale[None, :]).reshape(B, C_in, 1)

        xu_pad = xu if n_pad == N else jnp.pad(xu, ((0, 0), (0, 0), (0, n_pad - N)))

        num_tiles = n_pad // tn
        vmem = int(min(max(per_col * tn + fixed + 8 * _MIB, 16 * _MIB), 36 * _MIB))
        out = pl.pallas_call(
            _tiled_kernel,
            out_shape=jax.ShapeDtypeStruct((B, C_d, n_pad), f32),
            grid_spec=pltpu.PrefetchScalarGridSpec(
                num_scalar_prefetch=0,
                grid=(B, num_tiles),
                in_specs=[
                    pl.BlockSpec((1, C_in, tn), lambda b, j: (b, 0, j)),   # x_up tile
                    pl.BlockSpec((1, C_d, P), lambda b, j: (b, 0, 0)),     # x_down
                    pl.BlockSpec((1, C_in, 1), lambda b, j: (b, 0, 0)),    # folded scale A
                    pl.BlockSpec((1, C_in, 1), lambda b, j: (b, 0, 0)),    # folded shift C
                    pl.BlockSpec((P, C_in), lambda b, j: (0, 0)),          # conv weight
                    pl.BlockSpec((P, 1), lambda b, j: (0, 0)),             # conv bias
                ],
                out_specs=pl.BlockSpec((1, C_d, tn), lambda b, j: (b, 0, j)),
            ),
            compiler_params=pltpu.CompilerParams(
                dimension_semantics=("parallel", "parallel"),
                vmem_limit_bytes=vmem,
            ),
        )(xu_pad, xd, a_fold, c_fold, w, bias)

    if n_pad != N:
        out = out[:, :, :N]
    return out[..., None]                                # (B, C_d, N, 1)


def diff_unpool_ref(x_up, x_down, gamma, beta, run_mean, run_var, conv_w, conv_b):
    """Pure-JAX reference for verification (mirrors the PyTorch eval-mode forward)."""
    xu = x_up[..., 0].astype(jnp.float32)                # (B, C_in, N)
    xd = x_down[..., 0].astype(jnp.float32)              # (B, C_d, P)
    mu = jnp.mean(xu, axis=-1, keepdims=True)
    var = jnp.mean((xu - mu) ** 2, axis=-1, keepdims=True)
    xn = (xu - mu) / jnp.sqrt(var + IN_EPS)
    g = gamma.reshape(1, -1, 1); bt = beta.reshape(1, -1, 1)
    rm = run_mean.reshape(1, -1, 1); rv = run_var.reshape(1, -1, 1)
    y = g * (xn - rm) / jnp.sqrt(rv + BN_EPS) + bt
    y = jnp.maximum(y, 0.0)
    embed = jnp.einsum('pc,bcn->bpn', conv_w, y) + conv_b.reshape(1, -1, 1)
    s = jax.nn.softmax(embed, axis=1)
    out = jnp.einsum('bcp,bpn->bcn', xd, s)
    return out[..., None]


if __name__ == "__main__":
    key = jax.random.PRNGKey(0)
    k1, k2, k3, k4, k5, k6 = jax.random.split(key, 6)

    # ---- Case 1: tiny module-consistent shapes -> whole-N-per-batch path ----
    B, C_in, N = 2, 4, 16
    P = 8           # output_points
    C_d = 6         # channels of the downsampled feature map
    x_up = jax.random.normal(k1, (B, C_in, N, 1), dtype=jnp.float32)
    x_down = jax.random.normal(k2, (B, C_d, P, 1), dtype=jnp.float32)
    gamma = jnp.ones((C_in,), jnp.float32)
    beta = jnp.zeros((C_in,), jnp.float32)
    run_mean = jnp.zeros((C_in,), jnp.float32)
    run_var = jnp.ones((C_in,), jnp.float32)
    conv_w = 0.1 * jax.random.normal(k3, (P, C_in), dtype=jnp.float32)
    conv_b = 0.1 * jax.random.normal(k4, (P,), dtype=jnp.float32)

    out1 = jax.block_until_ready(
        diff_unpool(x_up, x_down, gamma, beta, run_mean, run_var, conv_w, conv_b))
    ref1 = diff_unpool_ref(x_up, x_down, gamma, beta, run_mean, run_var, conv_w, conv_b)
    assert out1.shape == (B, C_d, N, 1), out1.shape
    assert jnp.allclose(out1, ref1, atol=5e-5, rtol=5e-5), float(jnp.max(jnp.abs(out1 - ref1)))

    # ---- Case 2: force the N-tiled path (multi-tile grid, padding, folded IN/BN params) ----
    B2, C2, N2 = 2, 8, 300
    x_up2 = jax.random.normal(k5, (B2, C2, N2, 1), dtype=jnp.float32)
    x_down2 = jax.random.normal(k6, (B2, C_d, P, 1), dtype=jnp.float32)
    gamma2 = jnp.linspace(0.5, 1.5, C2, dtype=jnp.float32)
    beta2 = jnp.linspace(-0.2, 0.2, C2, dtype=jnp.float32)
    run_mean2 = jnp.linspace(-0.1, 0.1, C2, dtype=jnp.float32)
    run_var2 = jnp.linspace(0.5, 2.0, C2, dtype=jnp.float32)
    conv_w2 = 0.1 * jax.random.normal(k3, (P, C2), dtype=jnp.float32)
    conv_b2 = 0.1 * jax.random.normal(k4, (P,), dtype=jnp.float32)

    out2 = jax.block_until_ready(
        diff_unpool(x_up2, x_down2, gamma2, beta2, run_mean2, run_var2, conv_w2, conv_b2,
                    force_tile_n=128))
    ref2 = diff_unpool_ref(x_up2, x_down2, gamma2, beta2, run_mean2, run_var2, conv_w2, conv_b2)
    assert out2.shape == (B2, C_d, N2, 1), out2.shape
    assert jnp.allclose(out2, ref2, atol=5e-5, rtol=5e-5), float(jnp.max(jnp.abs(out2 - ref2)))

    print("KERNEL_OK")
</pallas_src>

<mosaic_0001>
module attributes {stable_mosaic.version = 11 : i64} {
  func.func @_whole_kernel(%arg0: i32, %arg1: memref<1x4x128xf32, #tpu.memory_space<vmem>>, %arg2: memref<1x6x8xf32, #tpu.memory_space<vmem>>, %arg3: memref<4x1xf32, #tpu.memory_space<vmem>>, %arg4: memref<4x1xf32, #tpu.memory_space<vmem>>, %arg5: memref<8x4xf32, #tpu.memory_space<vmem>>, %arg6: memref<8x1xf32, #tpu.memory_space<vmem>>, %arg7: memref<1x6x128xf32, #tpu.memory_space<vmem>>) attributes {dimension_semantics = [#tpu.dimension_semantics<parallel>], iteration_bounds = array<i64: 2>, scalar_prefetch = 0 : i64, scratch_operands = 0 : i64, tpu.core_type = #tpu.core_type<tc>, window_params = [{transform_indices = @transform_0, window_bounds = array<i64: 1, 4, 128>}, {transform_indices = @transform_1, window_bounds = array<i64: 1, 6, 8>}, {pipeline_mode = #tpu.pipeline_mode<synchronous>, transform_indices = @transform_2, window_bounds = array<i64: 4, 1>}, {pipeline_mode = #tpu.pipeline_mode<synchronous>, transform_indices = @transform_3, window_bounds = array<i64: 4, 1>}, {pipeline_mode = #tpu.pipeline_mode<synchronous>, transform_indices = @transform_4, window_bounds = array<i64: 8, 4>}, {pipeline_mode = #tpu.pipeline_mode<synchronous>, transform_indices = @transform_5, window_bounds = array<i64: 8, 1>}, {transform_indices = @transform_6, window_bounds = array<i64: 1, 6, 128>}]} {
    %c0 = arith.constant 0 : index
    %c0_0 = arith.constant 0 : index
    %c0_1 = arith.constant 0 : index
    %0 = vector.load %arg1[%c0, %c0_0, %c0_1] : memref<1x4x128xf32, #tpu.memory_space<vmem>>, vector<1x4x128xf32>
    %1 = vector.shape_cast %0 : vector<1x4x128xf32> to vector<4x128xf32>
    %cst = arith.constant dense<0.000000e+00> : vector<4xf32>
    %2 = vector.multi_reduction <add>, %1, %cst [1] : vector<4x128xf32> to vector<4xf32>
    %3 = vector.shape_cast %2 : vector<4xf32> to vector<4x1xf32>
    %cst_2 = arith.constant 6.250000e-02 : f32
    %4 = vector.broadcast %cst_2 : f32 to vector<4x1xf32>
    %5 = arith.mulf %3, %4 : vector<4x1xf32>
    %6 = arith.mulf %1, %1 : vector<4x128xf32>
    %cst_3 = arith.constant dense<0.000000e+00> : vector<4xf32>
    %7 = vector.multi_reduction <add>, %6, %cst_3 [1] : vector<4x128xf32> to vector<4xf32>
    %8 = vector.shape_cast %7 : vector<4xf32> to vector<4x1xf32>
    %cst_4 = arith.constant 6.250000e-02 : f32
    %9 = vector.broadcast %cst_4 : f32 to vector<4x1xf32>
    %10 = arith.mulf %8, %9 : vector<4x1xf32>
    %11 = arith.mulf %5, %5 : vector<4x1xf32>
    %12 = arith.subf %10, %11 : vector<4x1xf32>
    %cst_5 = arith.constant 1.000000e-03 : f32
    %13 = vector.broadcast %cst_5 : f32 to vector<4x1xf32>
    %14 = arith.addf %12, %13 : vector<4x1xf32>
    %15 = math.rsqrt %14 : vector<4x1xf32>
    %c0_6 = arith.constant 0 : index
    %c0_7 = arith.constant 0 : index
    %16 = vector.load %arg3[%c0_6, %c0_7] : memref<4x1xf32, #tpu.memory_space<vmem>>, vector<4x1xf32>
    %17 = arith.mulf %15, %16 : vector<4x1xf32>
    %18 = vector.broadcast %5 : vector<4x1xf32> to vector<4x128xf32>
    %19 = arith.subf %1, %18 : vector<4x128xf32>
    %20 = vector.broadcast %17 : vector<4x1xf32> to vector<4x128xf32>
    %21 = arith.mulf %19, %20 : vector<4x128xf32>
    %c0_8 = arith.constant 0 : index
    %c0_9 = arith.constant 0 : index
    %22 = vector.load %arg4[%c0_8, %c0_9] : memref<4x1xf32, #tpu.memory_space<vmem>>, vector<4x1xf32>
    %23 = vector.broadcast %22 : vector<4x1xf32> to vector<4x128xf32>
    %24 = arith.addf %21, %23 : vector<4x128xf32>
    %cst_10 = arith.constant 0.000000e+00 : f32
    %25 = vector.broadcast %cst_10 : f32 to vector<4x128xf32>
    %26 = arith.maximumf %24, %25 : vector<4x128xf32>
    %c0_11 = arith.constant 0 : index
    %c0_12 = arith.constant 0 : index
    %c0_13 = arith.constant 0 : index
    %27 = vector.load %arg2[%c0_11, %c0_12, %c0_13] : memref<1x6x8xf32, #tpu.memory_space<vmem>>, vector<1x6x8xf32>
    %28 = vector.shape_cast %27 : vector<1x6x8xf32> to vector<6x8xf32>
    %c0_14 = arith.constant 0 : index
    %c0_15 = arith.constant 0 : index
    %29 = vector.load %arg5[%c0_14, %c0_15] : memref<8x4xf32, #tpu.memory_space<vmem>>, vector<8x4xf32>
    %cst_16 = arith.constant dense<0.000000e+00> : vector<8x128xf32>
    %30 = tpu.matmul %29, %26, %cst_16 {dimension_numbers = #tpu.dot_dimension_numbers<[1], [0], [0], [1], [0, 0, 1, 1], [], []>} : vector<8x4xf32>, vector<4x128xf32>, vector<8x128xf32> -> vector<8x128xf32>
    %c0_17 = arith.constant 0 : index
    %c0_18 = arith.constant 0 : index
    %31 = vector.load %arg6[%c0_17, %c0_18] : memref<8x1xf32, #tpu.memory_space<vmem>>, vector<8x1xf32>
    %32 = vector.broadcast %31 : vector<8x1xf32> to vector<8x128xf32>
    %33 = arith.addf %30, %32 : vector<8x128xf32>
    %cst_19 = arith.constant dense<0xFF800000> : vector<128xf32>
    %34 = vector.multi_reduction <maximumf>, %33, %cst_19 [0] : vector<8x128xf32> to vector<128xf32>
    %35 = vector.shape_cast %34 : vector<128xf32> to vector<1x128xf32>
    %36 = vector.broadcast %35 : vector<1x128xf32> to vector<8x128xf32>
    %37 = arith.subf %33, %36 : vector<8x128xf32>
    %38 = math.exp %37 : vector<8x128xf32>
    %cst_20 = arith.constant dense<0.000000e+00> : vector<128xf32>
    %39 = vector.multi_reduction <add>, %38, %cst_20 [0] : vector<8x128xf32> to vector<128xf32>
    %40 = vector.shape_cast %39 : vector<128xf32> to vector<1x128xf32>
    %cst_21 = arith.constant dense<0.000000e+00> : vector<6x128xf32>
    %41 = tpu.matmul %28, %38, %cst_21 {dimension_numbers = #tpu.dot_dimension_numbers<[1], [0], [0], [1], [0, 0, 1, 1], [], []>} : vector<6x8xf32>, vector<8x128xf32>, vector<6x128xf32> -> vector<6x128xf32>
    %42 = tpu.reciprocal %40 : vector<1x128xf32> -> vector<1x128xf32>
    %43 = vector.broadcast %42 : vector<1x128xf32> to vector<6x128xf32>
    %44 = arith.mulf %41, %43 : vector<6x128xf32>
    %c0_22 = arith.constant 0 : index
    %c0_23 = arith.constant 0 : index
    %c0_24 = arith.constant 0 : index
    %45 = vector.load %arg7[%c0_22, %c0_23, %c0_24] : memref<1x6x128xf32, #tpu.memory_space<vmem>>, vector<1x6x128xf32>
    %46 = vector.shape_cast %45 : vector<1x6x128xf32> to vector<6x128xf32>
    %47 = vector.shape_cast %44 : vector<6x128xf32> to vector<1x6x128xf32>
    tpu.vector_store %arg7[%c0_22, %c0_23, %c0_24], %47 {strides = array<i32>} : memref<1x6x128xf32, #tpu.memory_space<vmem>>, vector<1x6x128xf32>,
    return
  }
  func.func @transform_0(%arg0: i32) -> (i32, i32, i32) {
    %c0_i32 = arith.constant 0 : i32
    %c0_i32_0 = arith.constant 0 : i32
    %c0_i32_1 = arith.constant 0 : i32
    return %arg0, %c0_i32, %c0_i32_0 : i32, i32, i32
  }
  func.func @transform_1(%arg0: i32) -> (i32, i32, i32) {
    %c0_i32 = arith.constant 0 : i32
    %c0_i32_0 = arith.constant 0 : i32
    %c0_i32_1 = arith.constant 0 : i32
    return %arg0, %c0_i32, %c0_i32_0 : i32, i32, i32
  }
  func.func @transform_2(%arg0: i32) -> (i32, i32) {
    %c0_i32 = arith.constant 0 : i32
    %c0_i32_0 = arith.constant 0 : i32
    %c0_i32_1 = arith.constant 0 : i32
    return %c0_i32, %c0_i32_0 : i32, i32
  }
  func.func @transform_3(%arg0: i32) -> (i32, i32) {
    %c0_i32 = arith.constant 0 : i32
    %c0_i32_0 = arith.constant 0 : i32
    %c0_i32_1 = arith.constant 0 : i32
    return %c0_i32, %c0_i32_0 : i32, i32
  }
  func.func @transform_4(%arg0: i32) -> (i32, i32) {
    %c0_i32 = arith.constant 0 : i32
    %c0_i32_0 = arith.constant 0 : i32
    %c0_i32_1 = arith.constant 0 : i32
    return %c0_i32, %c0_i32_0 : i32, i32
  }
  func.func @transform_5(%arg0: i32) -> (i32, i32) {
    %c0_i32 = arith.constant 0 : i32
    %c0_i32_0 = arith.constant 0 : i32
    %c0_i32_1 = arith.constant 0 : i32
    return %c0_i32, %c0_i32_0 : i32, i32
  }
  func.func @transform_6(%arg0: i32) -> (i32, i32, i32) {
    %c0_i32 = arith.constant 0 : i32
    %c0_i32_0 = arith.constant 0 : i32
    %c0_i32_1 = arith.constant 0 : i32
    return %arg0, %c0_i32, %c0_i32_0 : i32, i32, i32
  }
}

</mosaic_0001>

<llo_original>
// kernel: tpu_custom_call.1
$region0: #{tpu_custom_call.1}
  #allocation0 [shape = 'u32[]', space=smem, size = 0x4, offset = 0x4, fixed_abs, tag = 'smem constant byte address 0x4 - core index']
  #allocation1 [shape = 'u32[144,128]{1,0:T(1,128)}', space=vmem, size = 0x12000, scoped, tag = 'internal scratch']
  %s0 = inlined_call_operand.vmem [shape: f32[2,4,128], index: 0, kind: input, shape index: {}]
  %s1 = inlined_call_operand.vmem [shape: f32[2,6,8], index: 1, kind: input, shape index: {}]
  %s2 = inlined_call_operand.vmem [shape: f32[4,1], index: 2, kind: input, shape index: {}]
  %s3 = inlined_call_operand.vmem [shape: f32[4,1], index: 3, kind: input, shape index: {}]
  %s4 = inlined_call_operand.vmem [shape: f32[8,4], index: 4, kind: input, shape index: {}]
  %s5 = inlined_call_operand.vmem [shape: f32[8,1], index: 5, kind: input, shape index: {}]
  %s6 = inlined_call_operand.vmem [shape: f32[2,6,128], index: 6, kind: output, shape index: {}]
  %s7 = sld [smem:[#allocation0]]
  $region57: #{tpu_custom_call.1} parent=0
    _
  %s9 = ssub.s32 1, %s7
  %s10 = scalar_select 0, %s9, %s7
  loop: start=0, step=1, limit=4
  $region2: #{tpu_custom_call.1} parent=0 // loop_pre_header
    _
  $region3: #{tpu_custom_call.1} parent=0 // loop_header
    %s12 = sphi 0, %s16
    %p13 = scmp.ge.s32.totalorder %s12, 4
    %s22 = sphi 0, %s24
    %s25 = sphi 0, %s22
    %s26 = sphi 0, %s25
    %s42 = sphi 0, %s26
    %s48 = sphi 0, %s50
    %s51 = sphi 0, %s48
    %s52 = sphi 0, %s51
    %s68 = sphi 0, %s52
    %s72 = sphi 0, %s72
    %s74 = sphi 0, %s72
    %s75 = sphi 0, %s74
    %s89 = sphi 0, %s75
    %s93 = sphi 0, %s93
    %s95 = sphi 0, %s93
    %s96 = sphi 0, %s95
    %s110 = sphi 0, %s96
    %s114 = sphi 0, %s114
    %s116 = sphi 0, %s114
    %s117 = sphi 0, %s116
    %s131 = sphi 0, %s117
    %s135 = sphi 0, %s135
    %s137 = sphi 0, %s135
    %s138 = sphi 0, %s137
    %s152 = sphi 0, %s138
    %s158 = sphi 0, %s160
    %s161 = sphi 0, %s158
    %s162 = sphi 0, %s161
    %s178 = sphi 0, %s162
  $region4: #{tpu_custom_call.1} parent=0 // loop_header_branch
    %15 = sbr.rel (%p13) target = $region8
  $region5: #{tpu_custom_call.1} parent=0 // loop_body
    %s17 = ssub.s32 %s12, 1
    %s18 = ssub.s32 %s12, 2
    %s19 = sadd.s32 %s12, 1
    %s20 = ssub.s32 %s12, %s19
    %p21 = scmp.eq.s32.totalorder %s20, 0
    %s23 = sadd.s32 %s22, 1
    %s24 = scalar_select %p21, %s22, %s23
    %p27 = pneg %p21
    %p28 = scmp.eq.s32.totalorder %s12, 1
    %p29 = por %p27, %p28
    %p30 = scmp.ne.s32.totalorder %s22, %s25
    %p31 = scmp.eq.s32.totalorder %s12, 0
    %p32 = por %p30, %p31
    %p33 = scmp.ne.s32.totalorder %s22, %s25
    %p34 = scmp.eq.s32.totalorder %s17, 1
    %p35 = por %p33, %p34
    %p36 = scmp.ne.s32.totalorder %s25, %s26
    %p37 = scmp.eq.s32.totalorder %s17, 0
    %p38 = por %p36, %p37
    %p39 = scmp.ne.s32.totalorder %s25, %s26
    %p40 = scmp.eq.s32.totalorder %s18, 1
    %p41 = por %p39, %p40
    %p43 = scmp.ne.s32.totalorder %s26, %s42
    %p44 = scmp.eq.s32.totalorder %s18, 0
    %p45 = por %p43, %p44
    %s46 = ssub.s32 %s12, %s19
    %p47 = scmp.eq.s32.totalorder %s46, 0
    %s49 = sadd.s32 %s48, 1
    %s50 = scalar_select %p47, %s48, %s49
    %p53 = pneg %p47
    %p54 = scmp.eq.s32.totalorder %s12, 1
    %p55 = por %p53, %p54
    %p56 = scmp.ne.s32.totalorder %s48, %s51
    %p57 = scmp.eq.s32.totalorder %s12, 0
    %p58 = por %p56, %p57
    %p59 = scmp.ne.s32.totalorder %s48, %s51
    %p60 = scmp.eq.s32.totalorder %s17, 1
    %p61 = por %p59, %p60
    %p62 = scmp.ne.s32.totalorder %s51, %s52
    %p63 = scmp.eq.s32.totalorder %s17, 0
    %p64 = por %p62, %p63
    %p65 = scmp.ne.s32.totalorder %s51, %s52
    %p66 = scmp.eq.s32.totalorder %s18, 1
    %p67 = por %p65, %p66
    %p69 = scmp.ne.s32.totalorder %s52, %s68
    %p70 = scmp.eq.s32.totalorder %s18, 0
    %p71 = por %p69, %p70
    %s73 = sadd.s32 %s72, 1
    %p76 = scmp.eq.s32.totalorder %s12, 1
    %p77 = scmp.ne.s32.totalorder %s72, %s74
    %p78 = scmp.eq.s32.totalorder %s12, 0
    %p79 = por %p77, %p78
    %p80 = scmp.ne.s32.totalorder %s72, %s74
    %p81 = scmp.eq.s32.totalorder %s17, 1
    %p82 = por %p80, %p81
    %p83 = scmp.ne.s32.totalorder %s74, %s75
    %p84 = scmp.eq.s32.totalorder %s17, 0
    %p85 = por %p83, %p84
    %p86 = scmp.ne.s32.totalorder %s74, %s75
    %p87 = scmp.eq.s32.totalorder %s18, 1
    %p88 = por %p86, %p87
    %p90 = scmp.ne.s32.totalorder %s75, %s89
    %p91 = scmp.eq.s32.totalorder %s18, 0
    %p92 = por %p90, %p91
    %s94 = sadd.s32 %s93, 1
    %p97 = scmp.eq.s32.totalorder %s12, 1
    %p98 = scmp.ne.s32.totalorder %s93, %s95
    %p99 = scmp.eq.s32.totalorder %s12, 0
    %p100 = por %p98, %p99
    %p101 = scmp.ne.s32.totalorder %s93, %s95
    %p102 = scmp.eq.s32.totalorder %s17, 1
    %p103 = por %p101, %p102
    %p104 = scmp.ne.s32.totalorder %s95, %s96
    %p105 = scmp.eq.s32.totalorder %s17, 0
    %p106 = por %p104, %p105
    %p107 = scmp.ne.s32.totalorder %s95, %s96
    %p108 = scmp.eq.s32.totalorder %s18, 1
    %p109 = por %p107, %p108
    %p111 = scmp.ne.s32.totalorder %s96, %s110
    %p112 = scmp.eq.s32.totalorder %s18, 0
    %p113 = por %p111, %p112
    %s115 = sadd.s32 %s114, 1
    %p118 = scmp.eq.s32.totalorder %s12, 1
    %p119 = scmp.ne.s32.totalorder %s114, %s116
    %p120 = scmp.eq.s32.totalorder %s12, 0
    %p121 = por %p119, %p120
    %p122 = scmp.ne.s32.totalorder %s114, %s116
    %p123 = scmp.eq.s32.totalorder %s17, 1
    %p124 = por %p122, %p123
    %p125 = scmp.ne.s32.totalorder %s116, %s117
    %p126 = scmp.eq.s32.totalorder %s17, 0
    %p127 = por %p125, %p126
    %p128 = scmp.ne.s32.totalorder %s116, %s117
    %p129 = scmp.eq.s32.totalorder %s18, 1
    %p130 = por %p128, %p129
    %p132 = scmp.ne.s32.totalorder %s117, %s131
    %p133 = scmp.eq.s32.totalorder %s18, 0
    %p134 = por %p132, %p133
    %s136 = sadd.s32 %s135, 1
    %p139 = scmp.eq.s32.totalorder %s12, 1
    %p140 = scmp.ne.s32.totalorder %s135, %s137
    %p141 = scmp.eq.s32.totalorder %s12, 0
    %p142 = por %p140, %p141
    %p143 = scmp.ne.s32.totalorder %s135, %s137
    %p144 = scmp.eq.s32.totalorder %s17, 1
    %p145 = por %p143, %p144
    %p146 = scmp.ne.s32.totalorder %s137, %s138
    %p147 = scmp.eq.s32.totalorder %s17, 0
    %p148 = por %p146, %p147
    %p149 = scmp.ne.s32.totalorder %s137, %s138
    %p150 = scmp.eq.s32.totalorder %s18, 1
    %p151 = por %p149, %p150
    %p153 = scmp.ne.s32.totalorder %s138, %s152
    %p154 = scmp.eq.s32.totalorder %s18, 0
    %p155 = por %p153, %p154
    %s156 = ssub.s32 %s12, %s19
    %p157 = scmp.eq.s32.totalorder %s156, 0
    %s159 = sadd.s32 %s158, 1
    %s160 = scalar_select %p157, %s158, %s159
    %p163 = pneg %p157
    %p164 = scmp.eq.s32.totalorder %s12, 1
    %p165 = por %p163, %p164
    %p166 = scmp.ne.s32.totalorder %s158, %s161
    %p167 = scmp.eq.s32.totalorder %s12, 0
    %p168 = por %p166, %p167
    %p169 = scmp.ne.s32.totalorder %s158, %s161
    %p170 = scmp.eq.s32.totalorder %s17, 1
    %p171 = por %p169, %p170
    %p172 = scmp.ne.s32.totalorder %s161, %s162
    %p173 = scmp.eq.s32.totalorder %s17, 0
    %p174 = por %p172, %p173
    %p175 = scmp.ne.s32.totalorder %s161, %s162
    %p176 = scmp.eq.s32.totalorder %s18, 1
    %p177 = por %p175, %p176
    %p179 = scmp.ne.s32.totalorder %s162, %s178
    %p180 = scmp.eq.s32.totalorder %s18, 0
    %p181 = por %p179, %p180
    %p182 = scmp.le.s32.totalorder 1, %s12
    %p183 = scmp.lt.s32.totalorder %s12, 3
    %p184 = pnand %p182, %p183
    %p185 = pneg %p184
    // Predicated region
    $region9: #{tpu_custom_call.1} parent=5 // pred_check
      _
    $region10: #{tpu_custom_call.1} parent=5 // pred_check_branch
      %187 = sbr.rel (%p184) target = $region12
    $region11: #{tpu_custom_call.1} parent=5 // pred_region
      %s188 = ssub.s32 %s12, 1
      // Predicated region
      $region13: #{tpu_custom_call.1} parent=11 // pred_check
        %p189 = pneg %p85
      $region14: #{tpu_custom_call.1} parent=11 // pred_check_branch
        %191 = sbr.rel (%p189) target = $region16
      $region15: #{tpu_custom_call.1} parent=11 // pred_region
        _
      $region16: #{tpu_custom_call.1} parent=11 // pred_fallthru
        _
      // Predicated region
      $region17: #{tpu_custom_call.1} parent=11 // pred_check
        %p192 = pneg %p106
      $region18: #{tpu_custom_call.1} parent=11 // pred_check_branch
        %194 = sbr.rel (%p192) target = $region20
      $region19: #{tpu_custom_call.1} parent=11 // pred_region
        _
      $region20: #{tpu_custom_call.1} parent=11 // pred_fallthru
        _
      // Predicated region
      $region21: #{tpu_custom_call.1} parent=11 // pred_check
        %p195 = pneg %p127
      $region22: #{tpu_custom_call.1} parent=11 // pred_check_branch
        %197 = sbr.rel (%p195) target = $region24
      $region23: #{tpu_custom_call.1} parent=11 // pred_region
        _
      $region24: #{tpu_custom_call.1} parent=11 // pred_fallthru
        _
      // Predicated region
      $region25: #{tpu_custom_call.1} parent=11 // pred_check
        %p198 = pneg %p148
      $region26: #{tpu_custom_call.1} parent=11 // pred_check_branch
        %200 = sbr.rel (%p198) target = $region28
      $region27: #{tpu_custom_call.1} parent=11 // pred_region
        _
      $region28: #{tpu_custom_call.1} parent=11 // pred_fallthru
        _
    $region12: #{tpu_custom_call.1} parent=5 // pred_fallthru
      _
    %p201 = scmp.lt.s32.totalorder %s12, 2
    // Predicated region
    $region29: #{tpu_custom_call.1} parent=5 // pred_check
      %p202 = pneg %p201
    $region30: #{tpu_custom_call.1} parent=5 // pred_check_branch
      %204 = sbr.rel (%p202) target = $region32
    $region31: #{tpu_custom_call.1} parent=5 // pred_region
      // Predicated region
      $region33: #{tpu_custom_call.1} parent=31 // pred_check
        %p205 = pneg %p32
      $region34: #{tpu_custom_call.1} parent=31 // pred_check_branch
        %207 = sbr.rel (%p205) target = $region36
      $region35: #{tpu_custom_call.1} parent=31 // pred_region
        %p208 = scmp.lt.s32.totalorder %s12, 1
        %s209 = scalar_select %p208, %s12, 1
        %s210 = smul.addr %s209, 4
        %s211 = scalar_lea.vmem %s0, %s210
      $region36: #{tpu_custom_call.1} parent=31 // pred_fallthru
        _
      // Predicated region
      $region37: #{tpu_custom_call.1} parent=31 // pred_check
        %p212 = pneg %p58
      $region38: #{tpu_custom_call.1} parent=31 // pred_check_branch
        %214 = sbr.rel (%p212) target = $region40
      $region39: #{tpu_custom_call.1} parent=31 // pred_region
        %p215 = scmp.lt.s32.totalorder %s12, 1
        %s216 = scalar_select %p215, %s12, 1
        %s217 = smul.addr %s216, 8
        %s218 = scalar_lea.vmem %s1, %s217
      $region40: #{tpu_custom_call.1} parent=31 // pred_fallthru
        _
    $region32: #{tpu_custom_call.1} parent=5 // pred_fallthru
      _
    %p219 = scmp.le.s32.totalorder 1, %s12
    %p220 = scmp.lt.s32.totalorder %s12, 3
    %p221 = pnand %p219, %p220
    %p222 = pneg %p221
    // Predicated region
    $region41: #{tpu_custom_call.1} parent=5 // pred_check
      _
    $region42: #{tpu_custom_call.1} parent=5 // pred_check_branch
      %224 = sbr.rel (%p221) target = $region44
    $region43: #{tpu_custom_call.1} parent=5 // pred_region
      %s225 = ssub.s32 %s12, 1
      %p226 = scmp.lt.s32.totalorder %s17, 1
      %s227 = scalar_select %p226, %s17, 1
      %s228 = smul.addr %s227, 4
      %s229 = scalar_lea.vmem %s0, %s228
      %p230 = pneg %p38
      %p231 = pneg %p35
      %p232 = scmp.lt.s32.totalorder %s17, 1
      %s233 = scalar_select %p232, %s17, 1
      %s234 = smul.addr %s233, 8
      %s235 = scalar_lea.vmem %s1, %s234
      %p236 = pneg %p64
      %p237 = pneg %p61
      %p238 = pneg %p85
      %p239 = pneg %p82
      %p240 = pneg %p106
      %p241 = pneg %p103
      %p242 = pneg %p127
      %p243 = pneg %p124
      %p244 = pneg %p148
      %p245 = pneg %p145
      %p246 = pneg %p174
      %p247 = pneg %p171
      %p248 = scmp.lt.s32.totalorder %s17, 1
      %s249 = scalar_select %p248, %s17, 1
      %s250 = smul.addr %s249, 8
      %s251 = scalar_lea.vmem %s6, %s250
      %p252 = scmp.lt.s32.totalorder %s17, 1
      %s253 = scalar_select %p252, %s17, 1
      %s254 = smul.addr %s253, 4
      %s255 = scalar_lea.vmem %s0, %s254
      %p256 = scmp.lt.s32.totalorder %s17, 1
      %s257 = scalar_select %p256, %s17, 1
      %s258 = smul.addr %s257, 8
      %s259 = scalar_lea.vmem %s1, %s258
      %p260 = scmp.lt.s32.totalorder %s17, 1
      %s261 = scalar_select %p260, %s17, 1
      %s262 = smul.addr %s261, 8
      %s263 = scalar_lea.vmem %s6, %s262
      %v264 = vld [vmem:[%s255] sm:$0xf]
      %vm265 = vcmask 1043456
      %v266 = vsel %vm265, %v264, 0.0
      %267 = vadd.xlane.f32.xlu0 %v266
      %v268 = vpop.xlane.xlu0 %267
      %v269 = vmul.f32 %v268, 0.0625
      %v270 = vmul.f32 %v264, %v264
      %v271 = vsel %vm265, %v270, 0.0
      %272 = vadd.xlane.f32.xlu0 %v271
      %v273 = vpop.xlane.xlu0 %272
      %v274 = vmul.f32 %v273, 0.0625
      %v275 = vmul.f32 %v269, %v269
      %v276 = vsub.f32 %v274, %v275
      %v277 = vadd.f32 %v276, 0.001
      %v278 = vrsqrt.pop %v277
      %v279 = vld [vmem:[%s2] sm:$0xf]
      %v280 = vmul.f32 %v278, %v279
      %v281 = vsub.f32 %v264, %v269
      %283 = vset.pattern.permute.xlu0 0
      %284 = vperm.xlu0 %283, %v280
      %v285 = vpop.permute.xlu0 %284
      %v287 = vmul.f32 %v281, %v285
      %v288 = vld [vmem:[%s3] sm:$0xf]
      %290 = vset.pattern.permute.xlu0 0
      %291 = vperm.xlu0 %290, %v288
      %v292 = vpop.permute.xlu0 %291
      %v294 = vadd.f32 %v287, %v292
      %v295 = vmax.f32 %v294, 0.0
      %v296 = vld [vmem:[%s259] sm:$0x3f]
      %v297 = vld [vmem:[%s4] sm:$0xff]
      %v298 = vld [vmem:[%s5] sm:$0xff]
      %300 = vset.pattern.permute.xlu0 0
      %301 = vperm.xlu0 %300, %v298
      %v302 = vpop.permute.xlu0 %301
      %vm304 = vcmask 31744
      %v306 = vsel %vm304, %v297, 0
      %v309 = vsel %vm265, %v295, 0
      %311 = vmatprep.subr.mxu0 0.0
      %312 = vmatpush1.msra.mxu0 %v309
      %313 = vmatprep.subr.mxu0 0.0
      %314 = vmatpush1.msra.mxu0 0.0
      %315 = vmatprep.subr.mxu0 0.0
      %316 = vmatpush1.msra.mxu0 0.0
      %317 = vmatprep.subr.mxu0 0.0
      %318 = vmatpush1.msra.mxu0 0.0
      %319 = vmatprep.subr.mxu0 0.0
      %320 = vmatpush1.msra.mxu0 0.0
      %321 = vmatprep.subr.mxu0 0.0
      %322 = vmatpush1.msra.mxu0 0.0
      %323 = vmatprep.subr.mxu0 0.0
      %324 = vmatpush1.msra.mxu0 0.0
      %325 = vmatprep.subr.mxu0 0.0
      %326 = vmatpush1.msra.mxu0 0.0
      %327 = vmatprep.subr.mxu0 0.0
      %328 = vmatpush1.msra.mxu0 0.0
      %329 = vmatprep.subr.mxu0 0.0
      %330 = vmatpush1.msra.mxu0 0.0
      %331 = vmatprep.subr.mxu0 0.0
      %332 = vmatpush1.msra.mxu0 0.0
      %333 = vmatprep.subr.mxu0 0.0
      %334 = vmatpush1.msra.mxu0 0.0
      %335 = vmatprep.subr.mxu0 0.0
      %336 = vmatpush1.msra.mxu0 0.0
      %337 = vmatprep.subr.mxu0 0.0
      %338 = vmatpush1.msra.mxu0 0.0
      %339 = vmatprep.subr.mxu0 0.0
      %340 = vmatpush1.msra.mxu0 0.0
      %341 = vmatprep.subr.mxu0 0.0
      %342 = vmatpush1.msra.mxu0 0.0
      %343 = vmatprep.subr.mxu0 0.0
      %344 = vmatpush1.msra.mxu0 0.0
      %345 = vmatprep.subr.mxu0 0.0
      %346 = vmatpush1.msra.mxu0 0.0
      %347 = vmatprep.subr.mxu0 0.0
      %348 = vmatpush1.msra.mxu0 0.0
      %349 = vmatprep.subr.mxu0 0.0
      %350 = vmatpush1.msra.mxu0 0.0
      %351 = vmatprep.subr.mxu0 0.0
      %352 = vmatpush1.msra.mxu0 0.0
      %353 = vmatprep.subr.mxu0 0.0
      %354 = vmatpush1.msra.mxu0 0.0
      %355 = vmatprep.subr.mxu0 0.0
      %356 = vmatpush1.msra.mxu0 0.0
      %357 = vmatprep.subr.mxu0 0.0
      %358 = vmatpush1.msra.mxu0 0.0
      %359 = vmatprep.subr.mxu0 0.0
      %360 = vmatpush1.msra.mxu0 0.0
      %361 = vmatprep.subr.mxu0 0.0
      %362 = vmatpush1.msra.mxu0 0.0
      %363 = vmatprep.subr.mxu0 0.0
      %364 = vmatpush1.msra.mxu0 0.0
      %365 = vmatprep.subr.mxu0 0.0
      %366 = vmatpush1.msra.mxu0 0.0
      %367 = vmatprep.subr.mxu0 0.0
      %368 = vmatpush1.msra.mxu0 0.0
      %369 = vmatprep.subr.mxu0 0.0
      %370 = vmatpush1.msra.mxu0 0.0
      %371 = vmatprep.subr.mxu0 0.0
      %372 = vmatpush1.msra.mxu0 0.0
      %373 = vmatprep.subr.mxu0 0.0
      %374 = vmatpush1.msra.mxu0 0.0
      %375 = vmatprep.mubr.f32.mxu0 0.0
      %376 = vmatmul.mubr.f32.gmra.mrb[0].mxu0 %v306
      %v377 = vpop.f32.mrb[0].mxu0
      %v378 = vadd.f32 %v302, %v377
      %v379 = vpop.f32.mrb[0].mxu0
      %380 = vdwg.mxu0
      %v381 = vrot.slane %v378, 4
      %v382 = vmax.f32 %v378, %v381
      %v383 = vrot.slane %v382, 2
      %v384 = vmax.f32 %v382, %v383
      %v385 = vrot.slane %v384, 1
      %v386 = vmax.f32 %v384, %v385
      %v387 = vsub.f32 %v378, %v386
      %v388 = vmul.f32 %v387, 1.442695
      %v389 = vpow.pop %v388
      %v390 = vrot.slane %v389, 4
      %v391 = vadd.f32 %v389, %v390
      %v392 = vrot.slane %v391, 2
      %v393 = vadd.f32 %v391, %v392
      %v394 = vrot.slane %v393, 1
      %v395 = vadd.f32 %v393, %v394
      %vm396 = vcmask 64512
      %v398 = vsel %vm396, %v296, 0
      %400 = vmatprep.subr.mxu0 0.0
      %401 = vmatpush1.msra.mxu0 %v389
      %402 = vmatprep.subr.mxu0 0.0
      %403 = vmatpush1.msra.mxu0 0.0
      %404 = vmatprep.subr.mxu0 0.0
      %405 = vmatpush1.msra.mxu0 0.0
      %406 = vmatprep.subr.mxu0 0.0
      %407 = vmatpush1.msra.mxu0 0.0
      %408 = vmatprep.subr.mxu0 0.0
      %409 = vmatpush1.msra.mxu0 0.0
      %410 = vmatprep.subr.mxu0 0.0
      %411 = vmatpush1.msra.mxu0 0.0
      %412 = vmatprep.subr.mxu0 0.0
      %413 = vmatpush1.msra.mxu0 0.0
      %414 = vmatprep.subr.mxu0 0.0
      %415 = vmatpush1.msra.mxu0 0.0
      %416 = vmatprep.subr.mxu0 0.0
      %417 = vmatpush1.msra.mxu0 0.0
      %418 = vmatprep.subr.mxu0 0.0
      %419 = vmatpush1.msra.mxu0 0.0
      %420 = vmatprep.subr.mxu0 0.0
      %421 = vmatpush1.msra.mxu0 0.0
      %422 = vmatprep.subr.mxu0 0.0
      %423 = vmatpush1.msra.mxu0 0.0
      %424 = vmatprep.subr.mxu0 0.0
      %425 = vmatpush1.msra.mxu0 0.0
      %426 = vmatprep.subr.mxu0 0.0
      %427 = vmatpush1.msra.mxu0 0.0
      %428 = vmatprep.subr.mxu0 0.0
      %429 = vmatpush1.msra.mxu0 0.0
      %430 = vmatprep.subr.mxu0 0.0
      %431 = vmatpush1.msra.mxu0 0.0
      %432 = vmatprep.subr.mxu0 0.0
      %433 = vmatpush1.msra.mxu0 0.0
      %434 = vmatprep.subr.mxu0 0.0
      %435 = vmatpush1.msra.mxu0 0.0
      %436 = vmatprep.subr.mxu0 0.0
      %437 = vmatpush1.msra.mxu0 0.0
      %438 = vmatprep.subr.mxu0 0.0
      %439 = vmatpush1.msra.mxu0 0.0
      %440 = vmatprep.subr.mxu0 0.0
      %441 = vmatpush1.msra.mxu0 0.0
      %442 = vmatprep.subr.mxu0 0.0
      %443 = vmatpush1.msra.mxu0 0.0
      %444 = vmatprep.subr.mxu0 0.0
      %445 = vmatpush1.msra.mxu0 0.0
      %446 = vmatprep.subr.mxu0 0.0
      %447 = vmatpush1.msra.mxu0 0.0
      %448 = vmatprep.subr.mxu0 0.0
      %449 = vmatpush1.msra.mxu0 0.0
      %450 = vmatprep.subr.mxu0 0.0
      %451 = vmatpush1.msra.mxu0 0.0
      %452 = vmatprep.subr.mxu0 0.0
      %453 = vmatpush1.msra.mxu0 0.0
      %454 = vmatprep.subr.mxu0 0.0
      %455 = vmatpush1.msra.mxu0 0.0
      %456 = vmatprep.subr.mxu0 0.0
      %457 = vmatpush1.msra.mxu0 0.0
      %458 = vmatprep.subr.mxu0 0.0
      %459 = vmatpush1.msra.mxu0 0.0
      %460 = vmatprep.subr.mxu0 0.0
      %461 = vmatpush1.msra.mxu0 0.0
      %462 = vmatprep.subr.mxu0 0.0
      %463 = vmatpush1.msra.mxu0 0.0
      %464 = vmatprep.mubr.f32.mxu0 0.0
      %465 = vmatmul.mubr.f32.gmra.mrb[0].mxu0 %v398
      %v466 = vpop.f32.mrb[0].mxu0
      %v467 = vadd.f32 0.0, %v466
      %v468 = vpop.f32.mrb[0].mxu0
      %469 = vdwg.mxu0
      %v470 = vrcp.pop %v395
      %v471 = vmul.f32 %v467, %v470
      %472 = vst [vmem:[%s263] sm:$0x3f] %v471
      %p473 = scmp.lt.s32.totalorder %s17, 1
      %s474 = scalar_select %p473, %s17, 1
      %s475 = smul.addr %s474, 8
      %s476 = scalar_lea.vmem %s6, %s475
      // Predicated region
      $region45: #{tpu_custom_call.1} parent=43 // pred_check
        %p477 = pneg %p171
      $region46: #{tpu_custom_call.1} parent=43 // pred_check_branch
        %479 = sbr.rel (%p477) target = $region48
      $region47: #{tpu_custom_call.1} parent=43 // pred_region
        _
      $region48: #{tpu_custom_call.1} parent=43 // pred_fallthru
        _
    $region44: #{tpu_custom_call.1} parent=5 // pred_fallthru
      _
    %p480 = scmp.le.s32.totalorder 2, %s12
    // Predicated region
    $region49: #{tpu_custom_call.1} parent=5 // pred_check
      %p481 = pneg %p480
    $region50: #{tpu_custom_call.1} parent=5 // pred_check_branch
      %483 = sbr.rel (%p481) target = $region52
    $region51: #{tpu_custom_call.1} parent=5 // pred_region
      %s484 = ssub.s32 %s12, 2
      // Predicated region
      $region53: #{tpu_custom_call.1} parent=51 // pred_check
        %p485 = pneg %p177
      $region54: #{tpu_custom_call.1} parent=51 // pred_check_branch
        %487 = sbr.rel (%p485) target = $region56
      $region55: #{tpu_custom_call.1} parent=51 // pred_region
        %p488 = scmp.lt.s32.totalorder %s18, 1
        %s489 = scalar_select %p488, %s18, 1
        %s490 = smul.addr %s489, 8
        %s491 = scalar_lea.vmem %s6, %s490
      $region56: #{tpu_custom_call.1} parent=51 // pred_fallthru
        _
    $region52: #{tpu_custom_call.1} parent=5 // pred_fallthru
      _
  $region6: #{tpu_custom_call.1} parent=0 // loop_footer
    %s16 = sadd.s32 1, %s12
  $region7: #{tpu_custom_call.1} parent=0 // loop_footer_branch
    %11 = sbr.rel target = $region3
  $region8: #{tpu_custom_call.1} parent=0 // loop_exit
    _

</llo_original>
